<compile_context>
chip_gen: v7x
topology: tpu7x:2x2x1
jax: 0.10.0
libtpu: 0.0.40
codegen_flags: <defaults>
</compile_context>

<pallas_src>
import functools

import jax
import jax.numpy as jnp
from jax.experimental import pallas as pl
from jax.experimental.pallas import tpu as pltpu

_LANE = 128
_SUBLANE = 8


def _round_up(n, m):
    return ((n + m - 1) // m) * m


# ---------------------------------------------------------------------------
# Kernel
# ---------------------------------------------------------------------------
def _vae_kernel(x_ref, eps_ref,
                w1, w2, wml, w3, w4, w5, bias_ref,
                recon_ref, ml_ref,
                *, Dp, H0p, H1p, Lp):
    # Matmul operand dtype: float32 by default; pass bf16 weights from
    # prepare_vae_params(compute_dtype=jnp.bfloat16) on v6e/v7x for MXU-native
    # throughput (all elementwise / bias math stays f32 — required on v5e).
    cdt = w1.dtype

    # Unpack the packed bias row (all offsets are static multiples of 128).
    o = 0
    b1 = bias_ref[:, o:o + H0p]; o += H0p
    b2 = bias_ref[:, o:o + H1p]; o += H1p
    bml = bias_ref[:, o:o + 2 * Lp]; o += 2 * Lp
    b3 = bias_ref[:, o:o + H1p]; o += H1p
    b4 = bias_ref[:, o:o + H0p]; o += H0p
    b5 = bias_ref[:, o:o + Dp]

    x = x_ref[...]

    # ---- encoder (BatchNorm folded into the following Linear) ----
    h = jnp.maximum(
        jnp.dot(x.astype(cdt), w1[...], preferred_element_type=jnp.float32) + b1, 0.0)
    h = jnp.maximum(
        jnp.dot(h.astype(cdt), w2[...], preferred_element_type=jnp.float32) + b2, 0.0)

    # ---- fused mu|logvar head: one (H1p, 2*Lp) matmul ----
    ml = jnp.dot(h.astype(cdt), wml[...], preferred_element_type=jnp.float32) + bml
    mu = ml[:, :Lp]
    logvar = ml[:, Lp:]

    # ---- reparameterize: z = mu + eps * exp(0.5 * logvar) ----
    z = mu + eps_ref[...] * jnp.exp(0.5 * logvar)

    # ---- decoder ----
    d = jnp.maximum(
        jnp.dot(z.astype(cdt), w3[...], preferred_element_type=jnp.float32) + b3, 0.0)
    d = jnp.maximum(
        jnp.dot(d.astype(cdt), w4[...], preferred_element_type=jnp.float32) + b4, 0.0)
    recon = jnp.dot(d.astype(cdt), w5[...], preferred_element_type=jnp.float32) + b5

    recon_ref[...] = recon
    ml_ref[...] = ml


# ---------------------------------------------------------------------------
# Param init (PyTorch-equivalent) and one-time prep (fold / fuse / pad / pack)
# ---------------------------------------------------------------------------
def _linear_params(key, fan_in, fan_out):
    """PyTorch-style Linear init (uniform +-1/sqrt(fan_in)), weight as (in, out)."""
    kw, kb = jax.random.split(key)
    bound = 1.0 / jnp.sqrt(float(fan_in))
    w = jax.random.uniform(kw, (fan_in, fan_out), jnp.float32, -bound, bound)
    b = jax.random.uniform(kb, (1, fan_out), jnp.float32, -bound, bound)
    return w, b


def _bn_folded(features, eps=1e-5):
    """BatchNorm1d eval-mode as (scale, shift): gamma=1, beta=0, mean=0, var=1."""
    gamma = jnp.ones((1, features), jnp.float32)
    beta = jnp.zeros((1, features), jnp.float32)
    running_mean = jnp.zeros((1, features), jnp.float32)
    running_var = jnp.ones((1, features), jnp.float32)
    scale = gamma / jnp.sqrt(running_var + eps)
    shift = beta - running_mean * scale
    return scale, shift


def init_vae_params(key, input_dim, latent_dim=32, hidden_dims=(128, 64)):
    keys = jax.random.split(key, 7)
    h0, h1 = hidden_dims
    w1, b1 = _linear_params(keys[0], input_dim, h0)
    s1, t1 = _bn_folded(h0)
    w2, b2 = _linear_params(keys[1], h0, h1)
    s2, t2 = _bn_folded(h1)
    wmu, bmu = _linear_params(keys[2], h1, latent_dim)
    wlv, blv = _linear_params(keys[3], h1, latent_dim)
    w3, b3 = _linear_params(keys[4], latent_dim, h1)
    s3, t3 = _bn_folded(h1)
    w4, b4 = _linear_params(keys[5], h1, h0)
    s4, t4 = _bn_folded(h0)
    w5, b5 = _linear_params(keys[6], h0, input_dim)
    return (w1, b1, s1, t1, w2, b2, s2, t2,
            wmu, bmu, wlv, blv,
            w3, b3, s3, t3, w4, b4, s4, t4,
            w5, b5)


def prepare_vae_params(params, compute_dtype=jnp.float32):
    """One-time wrapper-side transform: fold BN into next Linear, fuse mu/logvar
    heads, zero-pad lane dims to multiples of 128, pack all biases into one row."""
    (w1, b1, s1, t1, w2, b2, s2, t2,
     wmu, bmu, wlv, blv,
     w3, b3, s3, t3, w4, b4, s4, t4,
     w5, b5) = params

    def fold(s, t, w, b):
        # (relu_out * s + t) @ w + b  ==  relu_out @ (s^T * w) + (t @ w + b)
        return s.reshape(-1, 1) * w, t @ w + b

    w2f, b2f = fold(s1, t1, w2, b2)
    wmuf, bmuf = fold(s2, t2, wmu, bmu)
    wlvf, blvf = fold(s2, t2, wlv, blv)
    w4f, b4f = fold(s3, t3, w4, b4)
    w5f, b5f = fold(s4, t4, w5, b5)

    D, H0 = w1.shape
    H1 = w2.shape[1]
    L = wmu.shape[1]
    Dp, H0p, H1p, Lp = (_round_up(d, _LANE) for d in (D, H0, H1, L))

    def pad_w(w, rp, cp):
        r, c = w.shape
        return jnp.pad(w, ((0, rp - r), (0, cp - c)))

    def pad_b(b, cp):
        return jnp.pad(b, ((0, 0), (0, cp - b.shape[1])))

    w1p = pad_w(w1, Dp, H0p)
    w2p = pad_w(w2f, H0p, H1p)
    wmlp = jnp.concatenate([pad_w(wmuf, H1p, Lp), pad_w(wlvf, H1p, Lp)], axis=1)
    w3p = pad_w(w3, Lp, H1p)
    w4p = pad_w(w4f, H1p, H0p)
    w5p = pad_w(w5f, H0p, Dp)

    bias = jnp.concatenate(
        [pad_b(b1, H0p), pad_b(b2f, H1p),
         pad_b(bmuf, Lp), pad_b(blvf, Lp),
         pad_b(b3, H1p), pad_b(b4f, H0p), pad_b(b5f, Dp)], axis=1)

    weights = tuple(w.astype(compute_dtype) for w in (w1p, w2p, wmlp, w3p, w4p, w5p))
    return weights + (bias.astype(jnp.float32),)


# ---------------------------------------------------------------------------
# Forward wrapper
# ---------------------------------------------------------------------------
@functools.partial(jax.jit, static_argnames=("tile_b",))
def vae_forward(x, eps, prepared, tile_b=256):
    """Fused VAE forward. x: (B, D) f32, eps: (B, latent) f32.
    Returns (recon (B, D), mu (B, latent), logvar (B, latent))."""
    w1, w2, wml, w3, w4, w5, bias = prepared
    B, D = x.shape
    L = eps.shape[1]
    Dp, H0p = w1.shape
    H1p = w2.shape[1]
    Lp = w3.shape[0]

    # Batch tile: sublane-aligned, capped at tile_b; pad B up to a multiple.
    tb = min(_round_up(B, _SUBLANE), tile_b)
    Bp = _round_up(B, tb)

    xp = jnp.pad(x.astype(jnp.float32), ((0, Bp - B), (0, Dp - D)))
    epsp = jnp.pad(eps.astype(jnp.float32), ((0, Bp - B), (0, Lp - L)))

    def act_spec(cols):
        return pl.BlockSpec((tb, cols), lambda i: (i, 0))

    def resident_spec(shape):
        # Constant index_map: block stays VMEM-resident across all grid steps.
        return pl.BlockSpec(shape, lambda i: (0, 0))

    kernel = functools.partial(_vae_kernel, Dp=Dp, H0p=H0p, H1p=H1p, Lp=Lp)

    # VMEM budget note (v7x 64 MiB): resident weights here are ~0.5 MiB f32;
    # activation double-buffers are tb*128*4 B each, so tile_b<=1024 is safe.
    recon_p, ml_p = pl.pallas_call(
        kernel,
        out_shape=(jax.ShapeDtypeStruct((Bp, Dp), jnp.float32),
                   jax.ShapeDtypeStruct((Bp, 2 * Lp), jnp.float32)),
        grid_spec=pltpu.PrefetchScalarGridSpec(
            num_scalar_prefetch=0,
            grid=(Bp // tb,),
            in_specs=[act_spec(Dp), act_spec(Lp),
                      resident_spec(w1.shape), resident_spec(w2.shape),
                      resident_spec(wml.shape), resident_spec(w3.shape),
                      resident_spec(w4.shape), resident_spec(w5.shape),
                      resident_spec(bias.shape)],
            out_specs=(act_spec(Dp), act_spec(2 * Lp)),
        ),
        compiler_params=pltpu.CompilerParams(
            dimension_semantics=("parallel",)),   # shards across v7x's 2 TCs
    )(xp, epsp, w1, w2, wml, w3, w4, w5, bias)

    recon = recon_p[:B, :D]
    mu = ml_p[:B, :L]
    logvar = ml_p[:B, Lp:Lp + L]
    return recon, mu, logvar


# ---------------------------------------------------------------------------
# Plain-JAX reference (unfolded / unfused, eval-mode semantics)
# ---------------------------------------------------------------------------
def vae_reference(x, eps, params):
    (w1, b1, s1, t1, w2, b2, s2, t2,
     wmu, bmu, wlv, blv,
     w3, b3, s3, t3, w4, b4, s4, t4,
     w5, b5) = params
    h = jnp.maximum(x @ w1 + b1, 0.0) * s1 + t1
    h = jnp.maximum(h @ w2 + b2, 0.0) * s2 + t2
    mu = h @ wmu + bmu
    logvar = h @ wlv + blv
    z = mu + eps * jnp.exp(0.5 * logvar)
    d = jnp.maximum(z @ w3 + b3, 0.0) * s3 + t3
    d = jnp.maximum(d @ w4 + b4, 0.0) * s4 + t4
    recon = d @ w5 + b5
    return recon, mu, logvar


if __name__ == "__main__":
    key = jax.random.PRNGKey(0)
    k_param, k_x, k_eps = jax.random.split(key, 3)

    B, D, LATENT = 8, 64, 32
    raw_params = init_vae_params(k_param, input_dim=D, latent_dim=LATENT,
                                 hidden_dims=(128, 64))
    prepared = prepare_vae_params(raw_params)  # fold BN, fuse heads, pad, pack

    x = jax.random.normal(k_x, (B, D), jnp.float32)
    eps = jax.random.normal(k_eps, (B, LATENT), jnp.float32)

    recon, mu, logvar = vae_forward(x, eps, prepared)
    jax.block_until_ready((recon, mu, logvar))

    r_ref, m_ref, lv_ref = vae_reference(x, eps, raw_params)
    assert recon.shape == (B, D) and mu.shape == (B, LATENT) and logvar.shape == (B, LATENT)
    assert jnp.allclose(recon, r_ref, atol=1e-4, rtol=1e-4)
    assert jnp.allclose(mu, m_ref, atol=1e-5, rtol=1e-5)
    assert jnp.allclose(logvar, lv_ref, atol=1e-5, rtol=1e-5)

    # Batch not a multiple of 8 (exercises the wrapper-side batch padding).
    B2 = 5
    x2 = jax.random.normal(jax.random.PRNGKey(1), (B2, D), jnp.float32)
    eps2 = jax.random.normal(jax.random.PRNGKey(2), (B2, LATENT), jnp.float32)
    r2, m2, lv2 = vae_forward(x2, eps2, prepared)
    jax.block_until_ready((r2, m2, lv2))
    r2_ref, m2_ref, lv2_ref = vae_reference(x2, eps2, raw_params)
    assert jnp.allclose(r2, r2_ref, atol=1e-4, rtol=1e-4)
    assert jnp.allclose(m2, m2_ref, atol=1e-5, rtol=1e-5)
    assert jnp.allclose(lv2, lv2_ref, atol=1e-5, rtol=1e-5)

    print("KERNEL_OK")
</pallas_src>

<mosaic_0001>
module attributes {stable_mosaic.version = 11 : i64} {
  func.func @_vae_kernel(%arg0: i32, %arg1: memref<8x128xf32, #tpu.memory_space<vmem>>, %arg2: memref<8x128xf32, #tpu.memory_space<vmem>>, %arg3: memref<128x128xf32, #tpu.memory_space<vmem>>, %arg4: memref<128x128xf32, #tpu.memory_space<vmem>>, %arg5: memref<128x256xf32, #tpu.memory_space<vmem>>, %arg6: memref<128x128xf32, #tpu.memory_space<vmem>>, %arg7: memref<128x128xf32, #tpu.memory_space<vmem>>, %arg8: memref<128x128xf32, #tpu.memory_space<vmem>>, %arg9: memref<1x896xf32, #tpu.memory_space<vmem>>, %arg10: memref<8x128xf32, #tpu.memory_space<vmem>>, %arg11: memref<8x256xf32, #tpu.memory_space<vmem>>) attributes {dimension_semantics = [#tpu.dimension_semantics<parallel>], iteration_bounds = array<i64: 1>, scalar_prefetch = 0 : i64, scratch_operands = 0 : i64, tpu.core_type = #tpu.core_type<tc>, window_params = [{transform_indices = @transform_0, window_bounds = array<i64: 8, 128>}, {transform_indices = @transform_1, window_bounds = array<i64: 8, 128>}, {pipeline_mode = #tpu.pipeline_mode<synchronous>, transform_indices = @transform_2, window_bounds = array<i64: 128, 128>}, {pipeline_mode = #tpu.pipeline_mode<synchronous>, transform_indices = @transform_3, window_bounds = array<i64: 128, 128>}, {pipeline_mode = #tpu.pipeline_mode<synchronous>, transform_indices = @transform_4, window_bounds = array<i64: 128, 256>}, {pipeline_mode = #tpu.pipeline_mode<synchronous>, transform_indices = @transform_5, window_bounds = array<i64: 128, 128>}, {pipeline_mode = #tpu.pipeline_mode<synchronous>, transform_indices = @transform_6, window_bounds = array<i64: 128, 128>}, {pipeline_mode = #tpu.pipeline_mode<synchronous>, transform_indices = @transform_7, window_bounds = array<i64: 128, 128>}, {pipeline_mode = #tpu.pipeline_mode<synchronous>, transform_indices = @transform_8, window_bounds = array<i64: 1, 896>}, {transform_indices = @transform_9, window_bounds = array<i64: 8, 128>}, {transform_indices = @transform_10, window_bounds = array<i64: 8, 256>}]} {
    %c0 = arith.constant 0 : index
    %c0_0 = arith.constant 0 : index
    %0 = vector.load %arg9[%c0, %c0_0] : memref<1x896xf32, #tpu.memory_space<vmem>>, vector<1x128xf32>
    %c0_1 = arith.constant 0 : index
    %c128 = arith.constant 128 : index
    %1 = vector.load %arg9[%c0_1, %c128] : memref<1x896xf32, #tpu.memory_space<vmem>>, vector<1x128xf32>
    %c0_2 = arith.constant 0 : index
    %c256 = arith.constant 256 : index
    %2 = vector.load %arg9[%c0_2, %c256] : memref<1x896xf32, #tpu.memory_space<vmem>>, vector<1x256xf32>
    %c0_3 = arith.constant 0 : index
    %c512 = arith.constant 512 : index
    %3 = vector.load %arg9[%c0_3, %c512] : memref<1x896xf32, #tpu.memory_space<vmem>>, vector<1x128xf32>
    %c0_4 = arith.constant 0 : index
    %c640 = arith.constant 640 : index
    %4 = vector.load %arg9[%c0_4, %c640] : memref<1x896xf32, #tpu.memory_space<vmem>>, vector<1x128xf32>
    %c0_5 = arith.constant 0 : index
    %c768 = arith.constant 768 : index
    %5 = vector.load %arg9[%c0_5, %c768] : memref<1x896xf32, #tpu.memory_space<vmem>>, vector<1x128xf32>
    %c0_6 = arith.constant 0 : index
    %c0_7 = arith.constant 0 : index
    %6 = vector.load %arg1[%c0_6, %c0_7] : memref<8x128xf32, #tpu.memory_space<vmem>>, vector<8x128xf32>
    %c0_8 = arith.constant 0 : index
    %c0_9 = arith.constant 0 : index
    %7 = vector.load %arg3[%c0_8, %c0_9] : memref<128x128xf32, #tpu.memory_space<vmem>>, vector<128x128xf32>
    %cst = arith.constant dense<0.000000e+00> : vector<8x128xf32>
    %8 = tpu.matmul %6, %7, %cst {dimension_numbers = #tpu.dot_dimension_numbers<[1], [0], [0], [1], [0, 0, 1, 1], [], []>} : vector<8x128xf32>, vector<128x128xf32>, vector<8x128xf32> -> vector<8x128xf32>
    %9 = vector.broadcast %0 : vector<1x128xf32> to vector<8x128xf32>
    %10 = arith.addf %8, %9 : vector<8x128xf32>
    %cst_10 = arith.constant 0.000000e+00 : f32
    %11 = vector.broadcast %cst_10 : f32 to vector<8x128xf32>
    %12 = arith.maximumf %10, %11 : vector<8x128xf32>
    %c0_11 = arith.constant 0 : index
    %c0_12 = arith.constant 0 : index
    %13 = vector.load %arg4[%c0_11, %c0_12] : memref<128x128xf32, #tpu.memory_space<vmem>>, vector<128x128xf32>
    %cst_13 = arith.constant dense<0.000000e+00> : vector<8x128xf32>
    %14 = tpu.matmul %12, %13, %cst_13 {dimension_numbers = #tpu.dot_dimension_numbers<[1], [0], [0], [1], [0, 0, 1, 1], [], []>} : vector<8x128xf32>, vector<128x128xf32>, vector<8x128xf32> -> vector<8x128xf32>
    %15 = vector.broadcast %1 : vector<1x128xf32> to vector<8x128xf32>
    %16 = arith.addf %14, %15 : vector<8x128xf32>
    %cst_14 = arith.constant 0.000000e+00 : f32
    %17 = vector.broadcast %cst_14 : f32 to vector<8x128xf32>
    %18 = arith.maximumf %16, %17 : vector<8x128xf32>
    %c0_15 = arith.constant 0 : index
    %c0_16 = arith.constant 0 : index
    %19 = vector.load %arg5[%c0_15, %c0_16] : memref<128x256xf32, #tpu.memory_space<vmem>>, vector<128x256xf32>
    %cst_17 = arith.constant dense<0.000000e+00> : vector<8x256xf32>
    %20 = tpu.matmul %18, %19, %cst_17 {dimension_numbers = #tpu.dot_dimension_numbers<[1], [0], [0], [1], [0, 0, 1, 1], [], []>} : vector<8x128xf32>, vector<128x256xf32>, vector<8x256xf32> -> vector<8x256xf32>
    %21 = vector.broadcast %2 : vector<1x256xf32> to vector<8x256xf32>
    %22 = arith.addf %20, %21 : vector<8x256xf32>
    %23 = vector.extract_strided_slice %22 {offsets = [0, 0], sizes = [8, 128], strides = [1, 1]} : vector<8x256xf32> to vector<8x128xf32>
    %24 = vector.extract_strided_slice %22 {offsets = [0, 128], sizes = [8, 128], strides = [1, 1]} : vector<8x256xf32> to vector<8x128xf32>
    %c0_18 = arith.constant 0 : index
    %c0_19 = arith.constant 0 : index
    %25 = vector.load %arg2[%c0_18, %c0_19] : memref<8x128xf32, #tpu.memory_space<vmem>>, vector<8x128xf32>
    %cst_20 = arith.constant 5.000000e-01 : f32
    %26 = vector.broadcast %cst_20 : f32 to vector<8x128xf32>
    %27 = arith.mulf %26, %24 : vector<8x128xf32>
    %28 = math.exp %27 : vector<8x128xf32>
    %29 = arith.mulf %25, %28 : vector<8x128xf32>
    %30 = arith.addf %23, %29 : vector<8x128xf32>
    %c0_21 = arith.constant 0 : index
    %c0_22 = arith.constant 0 : index
    %31 = vector.load %arg6[%c0_21, %c0_22] : memref<128x128xf32, #tpu.memory_space<vmem>>, vector<128x128xf32>
    %cst_23 = arith.constant dense<0.000000e+00> : vector<8x128xf32>
    %32 = tpu.matmul %30, %31, %cst_23 {dimension_numbers = #tpu.dot_dimension_numbers<[1], [0], [0], [1], [0, 0, 1, 1], [], []>} : vector<8x128xf32>, vector<128x128xf32>, vector<8x128xf32> -> vector<8x128xf32>
    %33 = vector.broadcast %3 : vector<1x128xf32> to vector<8x128xf32>
    %34 = arith.addf %32, %33 : vector<8x128xf32>
    %cst_24 = arith.constant 0.000000e+00 : f32
    %35 = vector.broadcast %cst_24 : f32 to vector<8x128xf32>
    %36 = arith.maximumf %34, %35 : vector<8x128xf32>
    %c0_25 = arith.constant 0 : index
    %c0_26 = arith.constant 0 : index
    %37 = vector.load %arg7[%c0_25, %c0_26] : memref<128x128xf32, #tpu.memory_space<vmem>>, vector<128x128xf32>
    %cst_27 = arith.constant dense<0.000000e+00> : vector<8x128xf32>
    %38 = tpu.matmul %36, %37, %cst_27 {dimension_numbers = #tpu.dot_dimension_numbers<[1], [0], [0], [1], [0, 0, 1, 1], [], []>} : vector<8x128xf32>, vector<128x128xf32>, vector<8x128xf32> -> vector<8x128xf32>
    %39 = vector.broadcast %4 : vector<1x128xf32> to vector<8x128xf32>
    %40 = arith.addf %38, %39 : vector<8x128xf32>
    %cst_28 = arith.constant 0.000000e+00 : f32
    %41 = vector.broadcast %cst_28 : f32 to vector<8x128xf32>
    %42 = arith.maximumf %40, %41 : vector<8x128xf32>
    %c0_29 = arith.constant 0 : index
    %c0_30 = arith.constant 0 : index
    %43 = vector.load %arg8[%c0_29, %c0_30] : memref<128x128xf32, #tpu.memory_space<vmem>>, vector<128x128xf32>
    %cst_31 = arith.constant dense<0.000000e+00> : vector<8x128xf32>
    %44 = tpu.matmul %42, %43, %cst_31 {dimension_numbers = #tpu.dot_dimension_numbers<[1], [0], [0], [1], [0, 0, 1, 1], [], []>} : vector<8x128xf32>, vector<128x128xf32>, vector<8x128xf32> -> vector<8x128xf32>
    %45 = vector.broadcast %5 : vector<1x128xf32> to vector<8x128xf32>
    %46 = arith.addf %44, %45 : vector<8x128xf32>
    %c0_32 = arith.constant 0 : index
    %c0_33 = arith.constant 0 : index
    %47 = vector.load %arg10[%c0_32, %c0_33] : memref<8x128xf32, #tpu.memory_space<vmem>>, vector<8x128xf32>
    tpu.vector_store %arg10[%c0_32, %c0_33], %46 {strides = array<i32>} : memref<8x128xf32, #tpu.memory_space<vmem>>, vector<8x128xf32>,
    %c0_34 = arith.constant 0 : index
    %c0_35 = arith.constant 0 : index
    %48 = vector.load %arg11[%c0_34, %c0_35] : memref<8x256xf32, #tpu.memory_space<vmem>>, vector<8x256xf32>
    tpu.vector_store %arg11[%c0_34, %c0_35], %22 {strides = array<i32>} : memref<8x256xf32, #tpu.memory_space<vmem>>, vector<8x256xf32>,
    return
  }
  func.func @transform_0(%arg0: i32) -> (i32, i32) {
    %c0_i32 = arith.constant 0 : i32
    %c0_i32_0 = arith.constant 0 : i32
    return %arg0, %c0_i32 : i32, i32
  }
  func.func @transform_1(%arg0: i32) -> (i32, i32) {
    %c0_i32 = arith.constant 0 : i32
    %c0_i32_0 = arith.constant 0 : i32
    return %arg0, %c0_i32 : i32, i32
  }
  func.func @transform_2(%arg0: i32) -> (i32, i32) {
    %c0_i32 = arith.constant 0 : i32
    %c0_i32_0 = arith.constant 0 : i32
    %c0_i32_1 = arith.constant 0 : i32
    return %c0_i32, %c0_i32_0 : i32, i32
  }
  func.func @transform_3(%arg0: i32) -> (i32, i32) {
    %c0_i32 = arith.constant 0 : i32
    %c0_i32_0 = arith.constant 0 : i32
    %c0_i32_1 = arith.constant 0 : i32
    return %c0_i32, %c0_i32_0 : i32, i32
  }
  func.func @transform_4(%arg0: i32) -> (i32, i32) {
    %c0_i32 = arith.constant 0 : i32
    %c0_i32_0 = arith.constant 0 : i32
    %c0_i32_1 = arith.constant 0 : i32
    return %c0_i32, %c0_i32_0 : i32, i32
  }
  func.func @transform_5(%arg0: i32) -> (i32, i32) {
    %c0_i32 = arith.constant 0 : i32
    %c0_i32_0 = arith.constant 0 : i32
    %c0_i32_1 = arith.constant 0 : i32
    return %c0_i32, %c0_i32_0 : i32, i32
  }
  func.func @transform_6(%arg0: i32) -> (i32, i32) {
    %c0_i32 = arith.constant 0 : i32
    %c0_i32_0 = arith.constant 0 : i32
    %c0_i32_1 = arith.constant 0 : i32
    return %c0_i32, %c0_i32_0 : i32, i32
  }
  func.func @transform_7(%arg0: i32) -> (i32, i32) {
    %c0_i32 = arith.constant 0 : i32
    %c0_i32_0 = arith.constant 0 : i32
    %c0_i32_1 = arith.constant 0 : i32
    return %c0_i32, %c0_i32_0 : i32, i32
  }
  func.func @transform_8(%arg0: i32) -> (i32, i32) {
    %c0_i32 = arith.constant 0 : i32
    %c0_i32_0 = arith.constant 0 : i32
    %c0_i32_1 = arith.constant 0 : i32
    return %c0_i32, %c0_i32_0 : i32, i32
  }
  func.func @transform_9(%arg0: i32) -> (i32, i32) {
    %c0_i32 = arith.constant 0 : i32
    %c0_i32_0 = arith.constant 0 : i32
    return %arg0, %c0_i32 : i32, i32
  }
  func.func @transform_10(%arg0: i32) -> (i32, i32) {
    %c0_i32 = arith.constant 0 : i32
    %c0_i32_0 = arith.constant 0 : i32
    return %arg0, %c0_i32 : i32, i32
  }
}

</mosaic_0001>

<llo_original>
// kernel: vae_forward.1
$region0: #{vae_forward.1}
  #allocation0 [shape = 'u32[]', space=smem, size = 0x4, offset = 0x4, fixed_abs, tag = 'smem constant byte address 0x4 - core index']
  #allocation1 [shape = 'u32[144,128]{1,0:T(1,128)}', space=vmem, size = 0x12000, scoped, tag = 'internal scratch']
  %s0 = inlined_call_operand.vmem [shape: f32[8,128], index: 0, kind: input, shape index: {}]
  %s1 = inlined_call_operand.vmem [shape: f32[8,128], index: 1, kind: input, shape index: {}]
  %s2 = inlined_call_operand.hbm [shape: f32[128,128], index: 2, kind: input, shape index: {}]
  %s3 = inlined_call_operand.hbm [shape: f32[128,128], index: 3, kind: input, shape index: {}]
  %s4 = inlined_call_operand.hbm [shape: f32[128,256], index: 4, kind: input, shape index: {}]
  %s5 = inlined_call_operand.hbm [shape: f32[128,128], index: 5, kind: input, shape index: {}]
  %s6 = inlined_call_operand.hbm [shape: f32[128,128], index: 6, kind: input, shape index: {}]
  %s7 = inlined_call_operand.hbm [shape: f32[128,128], index: 7, kind: input, shape index: {}]
  %s8 = inlined_call_operand.vmem [shape: f32[1,896], index: 8, kind: input, shape index: {}]
  %s9 = inlined_call_operand.hbm [shape: f32[8,128], index: 9, kind: output, shape index: {0}]
  %s10 = inlined_call_operand.vmem [shape: f32[8,256], index: 10, kind: output, shape index: {1}]
  %11 = xla_tuple %s9, %s10
  %s12 = sld [smem:[#allocation0]]
  $region78: #{vae_forward.1} parent=0
    _
  %s14 = ssub.s32 1, %s12
  %s15 = scalar_select 0, %s14, %s12
  $region1: #{vae_forward.1} parent=0
    #allocation2 [shape = 'u8[65536]{0}', space=vmem, size = 0x10000, scoped, tag = 'input window, operand 2, single buffered']
    #allocation3 [shape = 's32[1]{0}', space=sflag, size = 0x4, scoped, tag = 'scoped memory for vae_forward.1']
    #allocation4 [shape = 's32[1]{0}', space=sflag, size = 0x4, scoped, tag = 'scoped memory for vae_forward.1']
    #allocation5 [shape = 'u8[65536]{0}', space=vmem, size = 0x10000, scoped, tag = 'input window, operand 3, single buffered']
    #allocation6 [shape = 's32[1]{0}', space=sflag, size = 0x4, scoped, tag = 'scoped memory for vae_forward.1']
    #allocation7 [shape = 'u8[131072]{0}', space=vmem, size = 0x20000, scoped, tag = 'input window, operand 4, single buffered']
    #allocation8 [shape = 'u8[65536]{0}', space=vmem, size = 0x10000, scoped, tag = 'input window, operand 5, single buffered']
    #allocation9 [shape = 's32[1]{0}', space=sflag, size = 0x4, scoped, tag = 'scoped memory for vae_forward.1']
    #allocation10 [shape = 'u8[65536]{0}', space=vmem, size = 0x10000, scoped, tag = 'input window, operand 6, single buffered']
    #allocation11 [shape = 'u8[65536]{0}', space=vmem, size = 0x10000, scoped, tag = 'input window, operand 7, single buffered']
    #allocation12 [shape = 's32[1]{0}', space=sflag, size = 0x4, scoped, tag = 'scoped memory for vae_forward.1']
    #allocation13 [shape = 'u8[4096]{0}', space=vmem, size = 0x1000, scoped, tag = 'output window, operand 0, single buffered']
    %16 = vsyncpa [#allocation3], 0
    %17 = vsyncpa [#allocation6], 0
    %18 = vsyncpa [#allocation9], 0
    %19 = vsyncpa [#allocation12], 0
    %20 = vsyncpa [#allocation4], 0
    // Predicated region
    $region2: #{vae_forward.1} parent=1 // pred_check
      _
    $region3: #{vae_forward.1} parent=1 // pred_check_branch
      %22 = sbr.rel (0) target = $region5
    $region4: #{vae_forward.1} parent=1 // pred_region
      _
    $region5: #{vae_forward.1} parent=1 // pred_fallthru
      _
    // Predicated region
    $region6: #{vae_forward.1} parent=1 // pred_check
      _
    $region7: #{vae_forward.1} parent=1 // pred_check_branch
      %24 = sbr.rel (0) target = $region9
    $region8: #{vae_forward.1} parent=1 // pred_region
      _
    $region9: #{vae_forward.1} parent=1 // pred_fallthru
      _
    // Predicated region
    $region10: #{vae_forward.1} parent=1 // pred_check
      _
    $region11: #{vae_forward.1} parent=1 // pred_check_branch
      %26 = sbr.rel (0) target = $region13
    $region12: #{vae_forward.1} parent=1 // pred_region
      %s28 = ssub.s32 2048, 2048
      %29 = vsyncadd [#allocation3], %s28
      %s30 = sshll.u32 [#allocation2], 4
      %s31 = int_to_ptr.vmem [resolvable:$true] %s30
      %36 = dma.hbm_to_vmem [thread:$0]  %s2, 2048, %s31, [#allocation3], 128, 128, 8
    $region13: #{vae_forward.1} parent=1 // pred_fallthru
      _
    // Predicated region
    $region14: #{vae_forward.1} parent=1 // pred_check
      _
    $region15: #{vae_forward.1} parent=1 // pred_check_branch
      %38 = sbr.rel (0) target = $region17
    $region16: #{vae_forward.1} parent=1 // pred_region
      %s40 = ssub.s32 2048, 2048
      %41 = vsyncadd [#allocation6], %s40
      %s42 = sshll.u32 [#allocation5], 4
      %s43 = int_to_ptr.vmem [resolvable:$true] %s42
      %48 = dma.hbm_to_vmem [thread:$0]  %s3, 2048, %s43, [#allocation6], 128, 128, 8
    $region17: #{vae_forward.1} parent=1 // pred_fallthru
      _
    // Predicated region
    $region18: #{vae_forward.1} parent=1 // pred_check
      _
    $region19: #{vae_forward.1} parent=1 // pred_check_branch
      %50 = sbr.rel (0) target = $region21
    $region20: #{vae_forward.1} parent=1 // pred_region
      %s52 = ssub.s32 4096, 4096
      %53 = vsyncadd [#allocation6], %s52
      %s54 = sshll.u32 [#allocation7], 4
      %s55 = int_to_ptr.vmem [resolvable:$true] %s54
      %60 = dma.hbm_to_vmem [thread:$0]  %s4, 4096, %s55, [#allocation6], 256, 256, 16
    $region21: #{vae_forward.1} parent=1 // pred_fallthru
      _
    // Predicated region
    $region22: #{vae_forward.1} parent=1 // pred_check
      _
    $region23: #{vae_forward.1} parent=1 // pred_check_branch
      %62 = sbr.rel (0) target = $region25
    $region24: #{vae_forward.1} parent=1 // pred_region
      %s64 = ssub.s32 2048, 2048
      %65 = vsyncadd [#allocation9], %s64
      %s66 = sshll.u32 [#allocation8], 4
      %s67 = int_to_ptr.vmem [resolvable:$true] %s66
      %72 = dma.hbm_to_vmem [thread:$0]  %s5, 2048, %s67, [#allocation9], 128, 128, 8
    $region25: #{vae_forward.1} parent=1 // pred_fallthru
      _
    // Predicated region
    $region26: #{vae_forward.1} parent=1 // pred_check
      _
    $region27: #{vae_forward.1} parent=1 // pred_check_branch
      %74 = sbr.rel (0) target = $region29
    $region28: #{vae_forward.1} parent=1 // pred_region
      %s76 = ssub.s32 2048, 2048
      %77 = vsyncadd [#allocation9], %s76
      %s78 = sshll.u32 [#allocation10], 4
      %s79 = int_to_ptr.vmem [resolvable:$true] %s78
      %84 = dma.hbm_to_vmem [thread:$0]  %s6, 2048, %s79, [#allocation9], 128, 128, 8
    $region29: #{vae_forward.1} parent=1 // pred_fallthru
      _
    // Predicated region
    $region30: #{vae_forward.1} parent=1 // pred_check
      _
    $region31: #{vae_forward.1} parent=1 // pred_check_branch
      %86 = sbr.rel (0) target = $region33
    $region32: #{vae_forward.1} parent=1 // pred_region
      %s88 = ssub.s32 2048, 2048
      %89 = vsyncadd [#allocation12], %s88
      %s90 = sshll.u32 [#allocation11], 4
      %s91 = int_to_ptr.vmem [resolvable:$true] %s90
      %96 = dma.hbm_to_vmem [thread:$0]  %s7, 2048, %s91, [#allocation12], 128, 128, 8
    $region33: #{vae_forward.1} parent=1 // pred_fallthru
      _
    // Predicated region
    $region34: #{vae_forward.1} parent=1 // pred_check
      _
    $region35: #{vae_forward.1} parent=1 // pred_check_branch
      %98 = sbr.rel (0) target = $region37
    $region36: #{vae_forward.1} parent=1 // pred_region
      _
    $region37: #{vae_forward.1} parent=1 // pred_fallthru
      _
    // Predicated region
    $region38: #{vae_forward.1} parent=1 // pred_check
      _
    $region39: #{vae_forward.1} parent=1 // pred_check_branch
      %100 = sbr.rel (0) target = $region41
    $region40: #{vae_forward.1} parent=1 // pred_region
      %101 = dma.done [#allocation3], 2048
    $region41: #{vae_forward.1} parent=1 // pred_fallthru
      _
    // Predicated region
    $region42: #{vae_forward.1} parent=1 // pred_check
      _
    $region43: #{vae_forward.1} parent=1 // pred_check_branch
      %103 = sbr.rel (0) target = $region45
    $region44: #{vae_forward.1} parent=1 // pred_region
      %104 = dma.done [#allocation6], 2048
    $region45: #{vae_forward.1} parent=1 // pred_fallthru
      _
    // Predicated region
    $region46: #{vae_forward.1} parent=1 // pred_check
      _
    $region47: #{vae_forward.1} parent=1 // pred_check_branch
      %106 = sbr.rel (0) target = $region49
    $region48: #{vae_forward.1} parent=1 // pred_region
      %107 = dma.done [#allocation6], 4096
    $region49: #{vae_forward.1} parent=1 // pred_fallthru
      _
    // Predicated region
    $region50: #{vae_forward.1} parent=1 // pred_check
      _
    $region51: #{vae_forward.1} parent=1 // pred_check_branch
      %109 = sbr.rel (0) target = $region53
    $region52: #{vae_forward.1} parent=1 // pred_region
      %110 = dma.done [#allocation9], 2048
    $region53: #{vae_forward.1} parent=1 // pred_fallthru
      _
    // Predicated region
    $region54: #{vae_forward.1} parent=1 // pred_check
      _
    $region55: #{vae_forward.1} parent=1 // pred_check_branch
      %112 = sbr.rel (0) target = $region57
    $region56: #{vae_forward.1} parent=1 // pred_region
      %113 = dma.done [#allocation9], 2048
    $region57: #{vae_forward.1} parent=1 // pred_fallthru
      _
    // Predicated region
    $region58: #{vae_forward.1} parent=1 // pred_check
      _
    $region59: #{vae_forward.1} parent=1 // pred_check_branch
      %115 = sbr.rel (0) target = $region61
    $region60: #{vae_forward.1} parent=1 // pred_region
      %116 = dma.done [#allocation12], 2048
    $region61: #{vae_forward.1} parent=1 // pred_fallthru
      _
    %v117 = vld [vmem:[%s8] sm:$0x1]
    %v118 = vld [vmem:[%s8 + $0x1] sm:$0x1]
    %v119 = vld [vmem:[%s8 + $0x2] sm:$0x3]
    %v120 = vld [vmem:[%s8 + $0x4] sm:$0x1]
    %v121 = vld [vmem:[%s8 + $0x5] sm:$0x1]
    %v122 = vld [vmem:[%s8 + $0x6] sm:$0x1]
    %v123 = vld [vmem:[%s0] sm:$0xff]
    %v124 = vld [vmem:[#allocation2] sm:$0xff]
    %v125 = vld [vmem:[#allocation2 + $0x8] sm:$0xff]
    %v126 = vld [vmem:[#allocation2 + $0x10] sm:$0xff]
    %v127 = vld [vmem:[#allocation2 + $0x18] sm:$0xff]
    %v128 = vld [vmem:[#allocation2 + $0x20] sm:$0xff]
    %v129 = vld [vmem:[#allocation2 + $0x28] sm:$0xff]
    %v130 = vld [vmem:[#allocation2 + $0x30] sm:$0xff]
    %v131 = vld [vmem:[#allocation2 + $0x38] sm:$0xff]
    %v132 = vld [vmem:[#allocation2 + $0x40] sm:$0xff]
    %v133 = vld [vmem:[#allocation2 + $0x48] sm:$0xff]
    %v134 = vld [vmem:[#allocation2 + $0x50] sm:$0xff]
    %v135 = vld [vmem:[#allocation2 + $0x58] sm:$0xff]
    %v136 = vld [vmem:[#allocation2 + $0x60] sm:$0xff]
    %v137 = vld [vmem:[#allocation2 + $0x68] sm:$0xff]
    %v138 = vld [vmem:[#allocation2 + $0x70] sm:$0xff]
    %v139 = vld [vmem:[#allocation2 + $0x78] sm:$0xff]
    %v141 = vlaneseq
    %v142 = vshrl.u32 %v141, 7
    %v143 = vsub.s32 0, %v142
    %v144 = vrot.slane %v117, %v143
    %146 = vmatprep.subr.mxu0 0.0
    %147 = vmatpush1.msra.mxu0 %v124
    %148 = vmatprep.subr.mxu0 0.0
    %149 = vmatpush1.msra.mxu0 %v125
    %150 = vmatprep.subr.mxu0 0.0
    %151 = vmatpush1.msra.mxu0 %v126
    %152 = vmatprep.subr.mxu0 0.0
    %153 = vmatpush1.msra.mxu0 %v127
    %154 = vmatprep.subr.mxu0 0.0
    %155 = vmatpush1.msra.mxu0 %v128
    %156 = vmatprep.subr.mxu0 0.0
    %157 = vmatpush1.msra.mxu0 %v129
    %158 = vmatprep.subr.mxu0 0.0
    %159 = vmatpush1.msra.mxu0 %v130
    %160 = vmatprep.subr.mxu0 0.0
    %161 = vmatpush1.msra.mxu0 %v131
    %162 = vmatprep.subr.mxu0 0.0
    %163 = vmatpush1.msra.mxu0 %v132
    %164 = vmatprep.subr.mxu0 0.0
    %165 = vmatpush1.msra.mxu0 %v133
    %166 = vmatprep.subr.mxu0 0.0
    %167 = vmatpush1.msra.mxu0 %v134
    %168 = vmatprep.subr.mxu0 0.0
    %169 = vmatpush1.msra.mxu0 %v135
    %170 = vmatprep.subr.mxu0 0.0
    %171 = vmatpush1.msra.mxu0 %v136
    %172 = vmatprep.subr.mxu0 0.0
    %173 = vmatpush1.msra.mxu0 %v137
    %174 = vmatprep.subr.mxu0 0.0
    %175 = vmatpush1.msra.mxu0 %v138
    %176 = vmatprep.subr.mxu0 0.0
    %177 = vmatpush1.msra.mxu0 %v139
    %178 = vmatprep.subr.mxu0 0.0
    %179 = vmatpush1.msra.mxu0 0.0
    %180 = vmatprep.subr.mxu0 0.0
    %181 = vmatpush1.msra.mxu0 0.0
    %182 = vmatprep.subr.mxu0 0.0
    %183 = vmatpush1.msra.mxu0 0.0
    %184 = vmatprep.subr.mxu0 0.0
    %185 = vmatpush1.msra.mxu0 0.0
    %186 = vmatprep.subr.mxu0 0.0
    %187 = vmatpush1.msra.mxu0 0.0
    %188 = vmatprep.subr.mxu0 0.0
    %189 = vmatpush1.msra.mxu0 0.0
    %190 = vmatprep.subr.mxu0 0.0
    %191 = vmatpush1.msra.mxu0 0.0
    %192 = vmatprep.subr.mxu0 0.0
    %193 = vmatpush1.msra.mxu0 0.0
    %194 = vmatprep.subr.mxu0 0.0
    %195 = vmatpush1.msra.mxu0 0.0
    %196 = vmatprep.subr.mxu0 0.0
    %197 = vmatpush1.msra.mxu0 0.0
    %198 = vmatprep.subr.mxu0 0.0
    %199 = vmatpush1.msra.mxu0 0.0
    %200 = vmatprep.subr.mxu0 0.0
    %201 = vmatpush1.msra.mxu0 0.0
    %202 = vmatprep.subr.mxu0 0.0
    %203 = vmatpush1.msra.mxu0 0.0
    %204 = vmatprep.subr.mxu0 0.0
    %205 = vmatpush1.msra.mxu0 0.0
    %206 = vmatprep.subr.mxu0 0.0
    %207 = vmatpush1.msra.mxu0 0.0
    %208 = vmatprep.subr.mxu0 0.0
    %209 = vmatpush1.msra.mxu0 0.0
    %210 = vmatprep.mubr.f32.mxu0 0.0
    %211 = vmatmul.mubr.f32.gmra.mrb[0].mxu0 %v123
    %v212 = vpop.f32.mrb[0].mxu0
    %v213 = vadd.f32 %v144, %v212
    %v214 = vpop.f32.mrb[0].mxu0
    %215 = vdwg.mxu0
    %v216 = vmax.f32 %v213, 0.0
    %v217 = vld [vmem:[#allocation5] sm:$0xff]
    %v218 = vld [vmem:[#allocation5 + $0x8] sm:$0xff]
    %v219 = vld [vmem:[#allocation5 + $0x10] sm:$0xff]
    %v220 = vld [vmem:[#allocation5 + $0x18] sm:$0xff]
    %v221 = vld [vmem:[#allocation5 + $0x20] sm:$0xff]
    %v222 = vld [vmem:[#allocation5 + $0x28] sm:$0xff]
    %v223 = vld [vmem:[#allocation5 + $0x30] sm:$0xff]
    %v224 = vld [vmem:[#allocation5 + $0x38] sm:$0xff]
    %v225 = vld [vmem:[#allocation5 + $0x40] sm:$0xff]
    %v226 = vld [vmem:[#allocation5 + $0x48] sm:$0xff]
    %v227 = vld [vmem:[#allocation5 + $0x50] sm:$0xff]
    %v228 = vld [vmem:[#allocation5 + $0x58] sm:$0xff]
    %v229 = vld [vmem:[#allocation5 + $0x60] sm:$0xff]
    %v230 = vld [vmem:[#allocation5 + $0x68] sm:$0xff]
    %v231 = vld [vmem:[#allocation5 + $0x70] sm:$0xff]
    %v232 = vld [vmem:[#allocation5 + $0x78] sm:$0xff]
    %v234 = vlaneseq
    %v235 = vshrl.u32 %v234, 7
    %v236 = vsub.s32 0, %v235
    %v237 = vrot.slane %v118, %v236
    %239 = vmatprep.subr.mxu0 0.0
    %240 = vmatpush1.msra.mxu0 %v217
    %241 = vmatprep.subr.mxu0 0.0
    %242 = vmatpush1.msra.mxu0 %v218
    %243 = vmatprep.subr.mxu0 0.0
    %244 = vmatpush1.msra.mxu0 %v219
    %245 = vmatprep.subr.mxu0 0.0
    %246 = vmatpush1.msra.mxu0 %v220
    %247 = vmatprep.subr.mxu0 0.0
    %248 = vmatpush1.msra.mxu0 %v221
    %249 = vmatprep.subr.mxu0 0.0
    %250 = vmatpush1.msra.mxu0 %v222
    %251 = vmatprep.subr.mxu0 0.0
    %252 = vmatpush1.msra.mxu0 %v223
    %253 = vmatprep.subr.mxu0 0.0
    %254 = vmatpush1.msra.mxu0 %v224
    %255 = vmatprep.subr.mxu0 0.0
    %256 = vmatpush1.msra.mxu0 %v225
    %257 = vmatprep.subr.mxu0 0.0
    %258 = vmatpush1.msra.mxu0 %v226
    %259 = vmatprep.subr.mxu0 0.0
    %260 = vmatpush1.msra.mxu0 %v227
    %261 = vmatprep.subr.mxu0 0.0
    %262 = vmatpush1.msra.mxu0 %v228
    %263 = vmatprep.subr.mxu0 0.0
    %264 = vmatpush1.msra.mxu0 %v229
    %265 = vmatprep.subr.mxu0 0.0
    %266 = vmatpush1.msra.mxu0 %v230
    %267 = vmatprep.subr.mxu0 0.0
    %268 = vmatpush1.msra.mxu0 %v231
    %269 = vmatprep.subr.mxu0 0.0
    %270 = vmatpush1.msra.mxu0 %v232
    %271 = vmatprep.subr.mxu0 0.0
    %272 = vmatpush1.msra.mxu0 0.0
    %273 = vmatprep.subr.mxu0 0.0
    %274 = vmatpush1.msra.mxu0 0.0
    %275 = vmatprep.subr.mxu0 0.0
    %276 = vmatpush1.msra.mxu0 0.0
    %277 = vmatprep.subr.mxu0 0.0
    %278 = vmatpush1.msra.mxu0 0.0
    %279 = vmatprep.subr.mxu0 0.0
    %280 = vmatpush1.msra.mxu0 0.0
    %281 = vmatprep.subr.mxu0 0.0
    %282 = vmatpush1.msra.mxu0 0.0
    %283 = vmatprep.subr.mxu0 0.0
    %284 = vmatpush1.msra.mxu0 0.0
    %285 = vmatprep.subr.mxu0 0.0
    %286 = vmatpush1.msra.mxu0 0.0
    %287 = vmatprep.subr.mxu0 0.0
    %288 = vmatpush1.msra.mxu0 0.0
    %289 = vmatprep.subr.mxu0 0.0
    %290 = vmatpush1.msra.mxu0 0.0
    %291 = vmatprep.subr.mxu0 0.0
    %292 = vmatpush1.msra.mxu0 0.0
    %293 = vmatprep.subr.mxu0 0.0
    %294 = vmatpush1.msra.mxu0 0.0
    %295 = vmatprep.subr.mxu0 0.0
    %296 = vmatpush1.msra.mxu0 0.0
    %297 = vmatprep.subr.mxu0 0.0
    %298 = vmatpush1.msra.mxu0 0.0
    %299 = vmatprep.subr.mxu0 0.0
    %300 = vmatpush1.msra.mxu0 0.0
    %301 = vmatprep.subr.mxu0 0.0
    %302 = vmatpush1.msra.mxu0 0.0
    %303 = vmatprep.mubr.f32.mxu0 0.0
    %304 = vmatmul.mubr.f32.gmra.mrb[0].mxu0 %v216
    %v305 = vpop.f32.mrb[0].mxu0
    %v306 = vadd.f32 %v237, %v305
    %v307 = vpop.f32.mrb[0].mxu0
    %308 = vdwg.mxu0
    %v309 = vmax.f32 %v306, 0.0
    %v310 = vld [vmem:[#allocation7] sm:$0xff]
    %v311 = vld [vmem:[#allocation7 + $0x8] sm:$0xff]
    %v312 = vld [vmem:[#allocation7 + $0x10] sm:$0xff]
    %v313 = vld [vmem:[#allocation7 + $0x18] sm:$0xff]
    %v314 = vld [vmem:[#allocation7 + $0x20] sm:$0xff]
    %v315 = vld [vmem:[#allocation7 + $0x28] sm:$0xff]
    %v316 = vld [vmem:[#allocation7 + $0x30] sm:$0xff]
    %v317 = vld [vmem:[#allocation7 + $0x38] sm:$0xff]
    %v318 = vld [vmem:[#allocation7 + $0x40] sm:$0xff]
    %v319 = vld [vmem:[#allocation7 + $0x48] sm:$0xff]
    %v320 = vld [vmem:[#allocation7 + $0x50] sm:$0xff]
    %v321 = vld [vmem:[#allocation7 + $0x58] sm:$0xff]
    %v322 = vld [vmem:[#allocation7 + $0x60] sm:$0xff]
    %v323 = vld [vmem:[#allocation7 + $0x68] sm:$0xff]
    %v324 = vld [vmem:[#allocation7 + $0x70] sm:$0xff]
    %v325 = vld [vmem:[#allocation7 + $0x78] sm:$0xff]
    %v326 = vld [vmem:[#allocation7 + $0x80] sm:$0xff]
    %v327 = vld [vmem:[#allocation7 + $0x88] sm:$0xff]
    %v328 = vld [vmem:[#allocation7 + $0x90] sm:$0xff]
    %v329 = vld [vmem:[#allocation7 + $0x98] sm:$0xff]
    %v330 = vld [vmem:[#allocation7 + $0xa0] sm:$0xff]
    %v331 = vld [vmem:[#allocation7 + $0xa8] sm:$0xff]
    %v332 = vld [vmem:[#allocation7 + $0xb0] sm:$0xff]
    %v333 = vld [vmem:[#allocation7 + $0xb8] sm:$0xff]
    %v334 = vld [vmem:[#allocation7 + $0xc0] sm:$0xff]
    %v335 = vld [vmem:[#allocation7 + $0xc8] sm:$0xff]
    %v336 = vld [vmem:[#allocation7 + $0xd0] sm:$0xff]
    %v337 = vld [vmem:[#allocation7 + $0xd8] sm:$0xff]
    %v338 = vld [vmem:[#allocation7 + $0xe0] sm:$0xff]
    %v339 = vld [vmem:[#allocation7 + $0xe8] sm:$0xff]
    %v340 = vld [vmem:[#allocation7 + $0xf0] sm:$0xff]
    %v341 = vld [vmem:[#allocation7 + $0xf8] sm:$0xff]
    %v343 = vlaneseq
    %v344 = vshrl.u32 %v343, 7
    %v345 = vsub.s32 0, %v344
    %v346 = vrot.slane %v119, %v345
    %v347 = vlaneseq
    %v348 = vshrl.u32 %v347, 7
    %v349 = vsub.s32 1, %v348
    %v350 = vrot.slane %v119, %v349
    %353 = vmatprep.subr.mxu0 %v311
    %354 = vmatpush1.msra.mxu0 %v310
    %355 = vmatprep.subr.mxu0 %v313
    %356 = vmatpush1.msra.mxu0 %v312
    %357 = vmatprep.subr.mxu0 %v315
    %358 = vmatpush1.msra.mxu0 %v314
    %359 = vmatprep.subr.mxu0 %v317
    %360 = vmatpush1.msra.mxu0 %v316
    %361 = vmatprep.subr.mxu0 %v319
    %362 = vmatpush1.msra.mxu0 %v318
    %363 = vmatprep.subr.mxu0 %v321
    %364 = vmatpush1.msra.mxu0 %v320
    %365 = vmatprep.subr.mxu0 %v323
    %366 = vmatpush1.msra.mxu0 %v322
    %367 = vmatprep.subr.mxu0 %v325
    %368 = vmatpush1.msra.mxu0 %v324
    %369 = vmatprep.subr.mxu0 %v327
    %370 = vmatpush1.msra.mxu0 %v326
    %371 = vmatprep.subr.mxu0 %v329
    %372 = vmatpush1.msra.mxu0 %v328
    %373 = vmatprep.subr.mxu0 %v331
    %374 = vmatpush1.msra.mxu0 %v330
    %375 = vmatprep.subr.mxu0 %v333
    %376 = vmatpush1.msra.mxu0 %v332
    %377 = vmatprep.subr.mxu0 %v335
    %378 = vmatpush1.msra.mxu0 %v334
    %379 = vmatprep.subr.mxu0 %v337
    %380 = vmatpush1.msra.mxu0 %v336
    %381 = vmatprep.subr.mxu0 %v339
    %382 = vmatpush1.msra.mxu0 %v338
    %383 = vmatprep.subr.mxu0 %v341
    %384 = vmatpush1.msra.mxu0 %v340
    %385 = vmatprep.subr.mxu0 0.0
    %386 = vmatpush1.msra.mxu0 0.0
    %387 = vmatprep.subr.mxu0 0.0
    %388 = vmatpush1.msra.mxu0 0.0
    %389 = vmatprep.subr.mxu0 0.0
    %390 = vmatpush1.msra.mxu0 0.0
    %391 = vmatprep.subr.mxu0 0.0
    %392 = vmatpush1.msra.mxu0 0.0
    %393 = vmatprep.subr.mxu0 0.0
    %394 = vmatpush1.msra.mxu0 0.0
    %395 = vmatprep.subr.mxu0 0.0
    %396 = vmatpush1.msra.mxu0 0.0
    %397 = vmatprep.subr.mxu0 0.0
    %398 = vmatpush1.msra.mxu0 0.0
    %399 = vmatprep.subr.mxu0 0.0
    %400 = vmatpush1.msra.mxu0 0.0
    %401 = vmatprep.subr.mxu0 0.0
    %402 = vmatpush1.msra.mxu0 0.0
    %403 = vmatprep.subr.mxu0 0.0
    %404 = vmatpush1.msra.mxu0 0.0
    %405 = vmatprep.subr.mxu0 0.0
    %406 = vmatpush1.msra.mxu0 0.0
    %407 = vmatprep.subr.mxu0 0.0
    %408 = vmatpush1.msra.mxu0 0.0
    %409 = vmatprep.subr.mxu0 0.0
    %410 = vmatpush1.msra.mxu0 0.0
    %411 = vmatprep.subr.mxu0 0.0
    %412 = vmatpush1.msra.mxu0 0.0
    %413 = vmatprep.subr.mxu0 0.0
    %414 = vmatpush1.msra.mxu0 0.0
    %415 = vmatprep.subr.mxu0 0.0
    %416 = vmatpush1.msra.mxu0 0.0
    %417 = vmatprep.mubr.f32.mxu0 0.0
    %418 = vmatmul.mubr.f32.gmra.mrb[0].mxu0 %v309
    %v419 = vpop.f32.mrb[0].mxu0
    %v420 = vadd.f32 %v346, %v419
    %v421 = vpop.f32.mrb[0].mxu0
    %v422 = vadd.f32 %v350, %v421
    %423 = vdwg.mxu0
    %v424 = vld [vmem:[%s1] sm:$0xff]
    %v425 = vmul.f32 %v422, 0.5
    %v426 = vmul.f32 %v425, 1.442695
    %v427 = vpow.pop %v426
    %v428 = vmul.f32 %v424, %v427
    %v429 = vadd.f32 %v420, %v428
    %v430 = vld [vmem:[#allocation8] sm:$0xff]
    %v431 = vld [vmem:[#allocation8 + $0x8] sm:$0xff]
    %v432 = vld [vmem:[#allocation8 + $0x10] sm:$0xff]
    %v433 = vld [vmem:[#allocation8 + $0x18] sm:$0xff]
    %v434 = vld [vmem:[#allocation8 + $0x20] sm:$0xff]
    %v435 = vld [vmem:[#allocation8 + $0x28] sm:$0xff]
    %v436 = vld [vmem:[#allocation8 + $0x30] sm:$0xff]
    %v437 = vld [vmem:[#allocation8 + $0x38] sm:$0xff]
    %v438 = vld [vmem:[#allocation8 + $0x40] sm:$0xff]
    %v439 = vld [vmem:[#allocation8 + $0x48] sm:$0xff]
    %v440 = vld [vmem:[#allocation8 + $0x50] sm:$0xff]
    %v441 = vld [vmem:[#allocation8 + $0x58] sm:$0xff]
    %v442 = vld [vmem:[#allocation8 + $0x60] sm:$0xff]
    %v443 = vld [vmem:[#allocation8 + $0x68] sm:$0xff]
    %v444 = vld [vmem:[#allocation8 + $0x70] sm:$0xff]
    %v445 = vld [vmem:[#allocation8 + $0x78] sm:$0xff]
    %v447 = vlaneseq
    %v448 = vshrl.u32 %v447, 7
    %v449 = vsub.s32 0, %v448
    %v450 = vrot.slane %v120, %v449
    %452 = vmatprep.subr.mxu0 0.0
    %453 = vmatpush1.msra.mxu0 %v430
    %454 = vmatprep.subr.mxu0 0.0
    %455 = vmatpush1.msra.mxu0 %v431
    %456 = vmatprep.subr.mxu0 0.0
    %457 = vmatpush1.msra.mxu0 %v432
    %458 = vmatprep.subr.mxu0 0.0
    %459 = vmatpush1.msra.mxu0 %v433
    %460 = vmatprep.subr.mxu0 0.0
    %461 = vmatpush1.msra.mxu0 %v434
    %462 = vmatprep.subr.mxu0 0.0
    %463 = vmatpush1.msra.mxu0 %v435
    %464 = vmatprep.subr.mxu0 0.0
    %465 = vmatpush1.msra.mxu0 %v436
    %466 = vmatprep.subr.mxu0 0.0
    %467 = vmatpush1.msra.mxu0 %v437
    %468 = vmatprep.subr.mxu0 0.0
    %469 = vmatpush1.msra.mxu0 %v438
    %470 = vmatprep.subr.mxu0 0.0
    %471 = vmatpush1.msra.mxu0 %v439
    %472 = vmatprep.subr.mxu0 0.0
    %473 = vmatpush1.msra.mxu0 %v440
    %474 = vmatprep.subr.mxu0 0.0
    %475 = vmatpush1.msra.mxu0 %v441
    %476 = vmatprep.subr.mxu0 0.0
    %477 = vmatpush1.msra.mxu0 %v442
    %478 = vmatprep.subr.mxu0 0.0
    %479 = vmatpush1.msra.mxu0 %v443
    %480 = vmatprep.subr.mxu0 0.0
    %481 = vmatpush1.msra.mxu0 %v444
    %482 = vmatprep.subr.mxu0 0.0
    %483 = vmatpush1.msra.mxu0 %v445
    %484 = vmatprep.subr.mxu0 0.0
    %485 = vmatpush1.msra.mxu0 0.0
    %486 = vmatprep.subr.mxu0 0.0
    %487 = vmatpush1.msra.mxu0 0.0
    %488 = vmatprep.subr.mxu0 0.0
    %489 = vmatpush1.msra.mxu0 0.0
    %490 = vmatprep.subr.mxu0 0.0
    %491 = vmatpush1.msra.mxu0 0.0
    %492 = vmatprep.subr.mxu0 0.0
    %493 = vmatpush1.msra.mxu0 0.0
    %494 = vmatprep.subr.mxu0 0.0
    %495 = vmatpush1.msra.mxu0 0.0
    %496 = vmatprep.subr.mxu0 0.0
    %497 = vmatpush1.msra.mxu0 0.0
    %498 = vmatprep.subr.mxu0 0.0
    %499 = vmatpush1.msra.mxu0 0.0
    %500 = vmatprep.subr.mxu0 0.0
    %501 = vmatpush1.msra.mxu0 0.0
    %502 = vmatprep.subr.mxu0 0.0
    %503 = vmatpush1.msra.mxu0 0.0
    %504 = vmatprep.subr.mxu0 0.0
    %505 = vmatpush1.msra.mxu0 0.0
    %506 = vmatprep.subr.mxu0 0.0
    %507 = vmatpush1.msra.mxu0 0.0
    %508 = vmatprep.subr.mxu0 0.0
    %509 = vmatpush1.msra.mxu0 0.0
    %510 = vmatprep.subr.mxu0 0.0
    %511 = vmatpush1.msra.mxu0 0.0
    %512 = vmatprep.subr.mxu0 0.0
    %513 = vmatpush1.msra.mxu0 0.0
    %514 = vmatprep.subr.mxu0 0.0
    %515 = vmatpush1.msra.mxu0 0.0
    %516 = vmatprep.mubr.f32.mxu0 0.0
    %517 = vmatmul.mubr.f32.gmra.mrb[0].mxu0 %v429
    %v518 = vpop.f32.mrb[0].mxu0
    %v519 = vadd.f32 %v450, %v518
    %v520 = vpop.f32.mrb[0].mxu0
    %521 = vdwg.mxu0
    %v522 = vmax.f32 %v519, 0.0
    %v523 = vld [vmem:[#allocation10] sm:$0xff]
    %v524 = vld [vmem:[#allocation10 + $0x8] sm:$0xff]
    %v525 = vld [vmem:[#allocation10 + $0x10] sm:$0xff]
    %v526 = vld [vmem:[#allocation10 + $0x18] sm:$0xff]
    %v527 = vld [vmem:[#allocation10 + $0x20] sm:$0xff]
    %v528 = vld [vmem:[#allocation10 + $0x28] sm:$0xff]
    %v529 = vld [vmem:[#allocation10 + $0x30] sm:$0xff]
    %v530 = vld [vmem:[#allocation10 + $0x38] sm:$0xff]
    %v531 = vld [vmem:[#allocation10 + $0x40] sm:$0xff]
    %v532 = vld [vmem:[#allocation10 + $0x48] sm:$0xff]
    %v533 = vld [vmem:[#allocation10 + $0x50] sm:$0xff]
    %v534 = vld [vmem:[#allocation10 + $0x58] sm:$0xff]
    %v535 = vld [vmem:[#allocation10 + $0x60] sm:$0xff]
    %v536 = vld [vmem:[#allocation10 + $0x68] sm:$0xff]
    %v537 = vld [vmem:[#allocation10 + $0x70] sm:$0xff]
    %v538 = vld [vmem:[#allocation10 + $0x78] sm:$0xff]
    %v540 = vlaneseq
    %v541 = vshrl.u32 %v540, 7
    %v542 = vsub.s32 0, %v541
    %v543 = vrot.slane %v121, %v542
    %545 = vmatprep.subr.mxu0 0.0
    %546 = vmatpush1.msra.mxu0 %v523
    %547 = vmatprep.subr.mxu0 0.0
    %548 = vmatpush1.msra.mxu0 %v524
    %549 = vmatprep.subr.mxu0 0.0
    %550 = vmatpush1.msra.mxu0 %v525
    %551 = vmatprep.subr.mxu0 0.0
    %552 = vmatpush1.msra.mxu0 %v526
    %553 = vmatprep.subr.mxu0 0.0
    %554 = vmatpush1.msra.mxu0 %v527
    %555 = vmatprep.subr.mxu0 0.0
    %556 = vmatpush1.msra.mxu0 %v528
    %557 = vmatprep.subr.mxu0 0.0
    %558 = vmatpush1.msra.mxu0 %v529
    %559 = vmatprep.subr.mxu0 0.0
    %560 = vmatpush1.msra.mxu0 %v530
    %561 = vmatprep.subr.mxu0 0.0
    %562 = vmatpush1.msra.mxu0 %v531
    %563 = vmatprep.subr.mxu0 0.0
    %564 = vmatpush1.msra.mxu0 %v532
    %565 = vmatprep.subr.mxu0 0.0
    %566 = vmatpush1.msra.mxu0 %v533
    %567 = vmatprep.subr.mxu0 0.0
    %568 = vmatpush1.msra.mxu0 %v534
    %569 = vmatprep.subr.mxu0 0.0
    %570 = vmatpush1.msra.mxu0 %v535
    %571 = vmatprep.subr.mxu0 0.0
    %572 = vmatpush1.msra.mxu0 %v536
    %573 = vmatprep.subr.mxu0 0.0
    %574 = vmatpush1.msra.mxu0 %v537
    %575 = vmatprep.subr.mxu0 0.0
    %576 = vmatpush1.msra.mxu0 %v538
    %577 = vmatprep.subr.mxu0 0.0
    %578 = vmatpush1.msra.mxu0 0.0
    %579 = vmatprep.subr.mxu0 0.0
    %580 = vmatpush1.msra.mxu0 0.0
    %581 = vmatprep.subr.mxu0 0.0
    %582 = vmatpush1.msra.mxu0 0.0
    %583 = vmatprep.subr.mxu0 0.0
    %584 = vmatpush1.msra.mxu0 0.0
    %585 = vmatprep.subr.mxu0 0.0
    %586 = vmatpush1.msra.mxu0 0.0
    %587 = vmatprep.subr.mxu0 0.0
    %588 = vmatpush1.msra.mxu0 0.0
    %589 = vmatprep.subr.mxu0 0.0
    %590 = vmatpush1.msra.mxu0 0.0
    %591 = vmatprep.subr.mxu0 0.0
    %592 = vmatpush1.msra.mxu0 0.0
    %593 = vmatprep.subr.mxu0 0.0
    %594 = vmatpush1.msra.mxu0 0.0
    %595 = vmatprep.subr.mxu0 0.0
    %596 = vmatpush1.msra.mxu0 0.0
    %597 = vmatprep.subr.mxu0 0.0
    %598 = vmatpush1.msra.mxu0 0.0
    %599 = vmatprep.subr.mxu0 0.0
    %600 = vmatpush1.msra.mxu0 0.0
    %601 = vmatprep.subr.mxu0 0.0
    %602 = vmatpush1.msra.mxu0 0.0
    %603 = vmatprep.subr.mxu0 0.0
    %604 = vmatpush1.msra.mxu0 0.0
    %605 = vmatprep.subr.mxu0 0.0
    %606 = vmatpush1.msra.mxu0 0.0
    %607 = vmatprep.subr.mxu0 0.0
    %608 = vmatpush1.msra.mxu0 0.0
    %609 = vmatprep.mubr.f32.mxu0 0.0
    %610 = vmatmul.mubr.f32.gmra.mrb[0].mxu0 %v522
    %v611 = vpop.f32.mrb[0].mxu0
    %v612 = vadd.f32 %v543, %v611
    %v613 = vpop.f32.mrb[0].mxu0
    %614 = vdwg.mxu0
    %v615 = vmax.f32 %v612, 0.0
    %v616 = vld [vmem:[#allocation11] sm:$0xff]
    %v617 = vld [vmem:[#allocation11 + $0x8] sm:$0xff]
    %v618 = vld [vmem:[#allocation11 + $0x10] sm:$0xff]
    %v619 = vld [vmem:[#allocation11 + $0x18] sm:$0xff]
    %v620 = vld [vmem:[#allocation11 + $0x20] sm:$0xff]
    %v621 = vld [vmem:[#allocation11 + $0x28] sm:$0xff]
    %v622 = vld [vmem:[#allocation11 + $0x30] sm:$0xff]
    %v623 = vld [vmem:[#allocation11 + $0x38] sm:$0xff]
    %v624 = vld [vmem:[#allocation11 + $0x40] sm:$0xff]
    %v625 = vld [vmem:[#allocation11 + $0x48] sm:$0xff]
    %v626 = vld [vmem:[#allocation11 + $0x50] sm:$0xff]
    %v627 = vld [vmem:[#allocation11 + $0x58] sm:$0xff]
    %v628 = vld [vmem:[#allocation11 + $0x60] sm:$0xff]
    %v629 = vld [vmem:[#allocation11 + $0x68] sm:$0xff]
    %v630 = vld [vmem:[#allocation11 + $0x70] sm:$0xff]
    %v631 = vld [vmem:[#allocation11 + $0x78] sm:$0xff]
    %v633 = vlaneseq
    %v634 = vshrl.u32 %v633, 7
    %v635 = vsub.s32 0, %v634
    %v636 = vrot.slane %v122, %v635
    %638 = vmatprep.subr.mxu0 0.0
    %639 = vmatpush1.msra.mxu0 %v616
    %640 = vmatprep.subr.mxu0 0.0
    %641 = vmatpush1.msra.mxu0 %v617
    %642 = vmatprep.subr.mxu0 0.0
    %643 = vmatpush1.msra.mxu0 %v618
    %644 = vmatprep.subr.mxu0 0.0
    %645 = vmatpush1.msra.mxu0 %v619
    %646 = vmatprep.subr.mxu0 0.0
    %647 = vmatpush1.msra.mxu0 %v620
    %648 = vmatprep.subr.mxu0 0.0
    %649 = vmatpush1.msra.mxu0 %v621
    %650 = vmatprep.subr.mxu0 0.0
    %651 = vmatpush1.msra.mxu0 %v622
    %652 = vmatprep.subr.mxu0 0.0
    %653 = vmatpush1.msra.mxu0 %v623
    %654 = vmatprep.subr.mxu0 0.0
    %655 = vmatpush1.msra.mxu0 %v624
    %656 = vmatprep.subr.mxu0 0.0
    %657 = vmatpush1.msra.mxu0 %v625
    %658 = vmatprep.subr.mxu0 0.0
    %659 = vmatpush1.msra.mxu0 %v626
    %660 = vmatprep.subr.mxu0 0.0
    %661 = vmatpush1.msra.mxu0 %v627
    %662 = vmatprep.subr.mxu0 0.0
    %663 = vmatpush1.msra.mxu0 %v628
    %664 = vmatprep.subr.mxu0 0.0
    %665 = vmatpush1.msra.mxu0 %v629
    %666 = vmatprep.subr.mxu0 0.0
    %667 = vmatpush1.msra.mxu0 %v630
    %668 = vmatprep.subr.mxu0 0.0
    %669 = vmatpush1.msra.mxu0 %v631
    %670 = vmatprep.subr.mxu0 0.0
    %671 = vmatpush1.msra.mxu0 0.0
    %672 = vmatprep.subr.mxu0 0.0
    %673 = vmatpush1.msra.mxu0 0.0
    %674 = vmatprep.subr.mxu0 0.0
    %675 = vmatpush1.msra.mxu0 0.0
    %676 = vmatprep.subr.mxu0 0.0
    %677 = vmatpush1.msra.mxu0 0.0
    %678 = vmatprep.subr.mxu0 0.0
    %679 = vmatpush1.msra.mxu0 0.0
    %680 = vmatprep.subr.mxu0 0.0
    %681 = vmatpush1.msra.mxu0 0.0
    %682 = vmatprep.subr.mxu0 0.0
    %683 = vmatpush1.msra.mxu0 0.0
    %684 = vmatprep.subr.mxu0 0.0
    %685 = vmatpush1.msra.mxu0 0.0
    %686 = vmatprep.subr.mxu0 0.0
    %687 = vmatpush1.msra.mxu0 0.0
    %688 = vmatprep.subr.mxu0 0.0
    %689 = vmatpush1.msra.mxu0 0.0
    %690 = vmatprep.subr.mxu0 0.0
    %691 = vmatpush1.msra.mxu0 0.0
    %692 = vmatprep.subr.mxu0 0.0
    %693 = vmatpush1.msra.mxu0 0.0
    %694 = vmatprep.subr.mxu0 0.0
    %695 = vmatpush1.msra.mxu0 0.0
    %696 = vmatprep.subr.mxu0 0.0
    %697 = vmatpush1.msra.mxu0 0.0
    %698 = vmatprep.subr.mxu0 0.0
    %699 = vmatpush1.msra.mxu0 0.0
    %700 = vmatprep.subr.mxu0 0.0
    %701 = vmatpush1.msra.mxu0 0.0
    %702 = vmatprep.mubr.f32.mxu0 0.0
    %703 = vmatmul.mubr.f32.gmra.mrb[0].mxu0 %v615
    %v704 = vpop.f32.mrb[0].mxu0
    %v705 = vadd.f32 %v636, %v704
    %v706 = vpop.f32.mrb[0].mxu0
    %707 = vdwg.mxu0
    %708 = vst [vmem:[#allocation13] sm:$0xff] %v705
    %709 = vst [vmem:[%s10] sm:$0xff] %v420
    %710 = vst [vmem:[%s10 + $0x8] sm:$0xff] %v422
    // Predicated region
    $region62: #{vae_forward.1} parent=1 // pred_check
      _
    $region63: #{vae_forward.1} parent=1 // pred_check_branch
      %712 = sbr.rel (0) target = $region65
    $region64: #{vae_forward.1} parent=1 // pred_region
      %s714 = ssub.s32 128, 128
      %715 = vsyncadd [#allocation4], %s714
      %s717 = sshll.u32 [#allocation13], 4
      %s718 = int_to_ptr.vmem [resolvable:$true] %s717
      %720 = dma.vmem_to_hbm [thread:$0]  %s718, 128, %s9, [#allocation4]
    $region65: #{vae_forward.1} parent=1 // pred_fallthru
      _
    // Predicated region
    $region66: #{vae_forward.1} parent=1 // pred_check
      _
    $region67: #{vae_forward.1} parent=1 // pred_check_branch
      %722 = sbr.rel (0) target = $region69
    $region68: #{vae_forward.1} parent=1 // pred_region
      _
    $region69: #{vae_forward.1} parent=1 // pred_fallthru
      _
    // Predicated region
    $region70: #{vae_forward.1} parent=1 // pred_check
      _
    $region71: #{vae_forward.1} parent=1 // pred_check_branch
      %724 = sbr.rel (0) target = $region73
    $region72: #{vae_forward.1} parent=1 // pred_region
      %725 = dma.done [#allocation4], 128
    $region73: #{vae_forward.1} parent=1 // pred_fallthru
      _
    // Predicated region
    $region74: #{vae_forward.1} parent=1 // pred_check
      _
    $region75: #{vae_forward.1} parent=1 // pred_check_branch
      %727 = sbr.rel (0) target = $region77
    $region76: #{vae_forward.1} parent=1 // pred_region
      _
    $region77: #{vae_forward.1} parent=1 // pred_fallthru
      _
    %728 = vsyncpa [#allocation3], 1
    %729 = vsyncpa [#allocation6], 1
    %730 = vsyncpa [#allocation9], 1
    %731 = vsyncpa [#allocation12], 1
    %732 = vsyncpa [#allocation4], 1

</llo_original>
